<compile_context>
chip_gen: v7x
topology: tpu7x:2x2x1
jax: 0.10.0
libtpu: 0.0.40
codegen_flags: <defaults>
</compile_context>

<pallas_src>
import numpy as np

import jax
import jax.numpy as jnp
from jax.experimental import pallas as pl
from jax.experimental.pallas import tpu as pltpu

_OUT_LANES = 8  # [1|q3 rot|3 trans|1 pad] for dof==3, [4 quat|3 trans|1 pad] for dof==4


def _frame_head_kernel(s_ref, w_ref, b_ref, out_ref):
    """One row tile: fused linear (+folded quat scalar) + quat normalize.

    s_ref:   [TILE_N, c_s]   native dtype (no upcast; MXU accumulates in f32)
    w_ref:   [c_s, 8]        same dtype as s, columns = [q0 q1 q2 q3 tx ty tz pad]
    b_ref:   [1, 8]          f32
    out_ref: [TILE_N, 8]     out dtype, [normalized quat (4) | trans (3) | pad (1)]
    """
    s = s_ref[...]
    w = w_ref[...]
    b = b_ref[...]

    out = jnp.dot(s, w, preferred_element_type=jnp.float32) + b   # [T, 8] f32

    # Normalize only the first 4 lanes (the quaternion); leave trans lanes alone.
    lane = jax.lax.broadcasted_iota(jnp.int32, (1, _OUT_LANES), 1)
    is_quat = lane < 4                                             # [1, 8], broadcast
    q = jnp.where(is_quat, out, 0.0)
    inv_norm = jax.lax.rsqrt(jnp.sum(q * q, axis=-1, keepdims=True))  # [T, 1]
    out_ref[...] = jnp.where(is_quat, out * inv_norm, out).astype(out_ref.dtype)


def _pad_params(weight, bias, dof, param_dtype):
    """Fold the quaternion scalar part into a padded [c_s, 8] weight / [1, 8] bias."""
    c_s = weight.shape[0]
    assert weight.shape == (c_s, dof + 3), weight.shape
    w_pad = jnp.zeros((c_s, _OUT_LANES), jnp.float32)
    b_pad = jnp.zeros((_OUT_LANES,), jnp.float32)
    if dof == 3:
        # columns: [1 (bias only), rot(3), trans(3), pad]
        w_pad = w_pad.at[:, 1:7].set(weight.astype(jnp.float32))
        b_pad = b_pad.at[0].set(1.0).at[1:7].set(bias.astype(jnp.float32))
    elif dof == 4:
        # columns: [quat(4), trans(3), pad]
        w_pad = w_pad.at[:, :7].set(weight.astype(jnp.float32))
        b_pad = b_pad.at[:7].set(bias.astype(jnp.float32))
    else:
        # TODO(synk): dof == 6 (ortho6d -> rotation matrix via Gram-Schmidt,
        # Rigid.from_tensor_9) not implemented in this kernel.
        raise NotImplementedError("dof must be 3 or 4 for this kernel")
    # Weight travels in the activation dtype (native-dtype MXU path); bias stays
    # f32 and is added to the f32 accumulator.
    return w_pad.astype(param_dtype), b_pad.reshape(1, _OUT_LANES)


def _tpu_vmem_capacity_bytes():
    try:
        return int(pltpu.get_tpu_info().vmem_capacity_bytes)
    except Exception:
        return 64 << 20  # conservative (v7x-sized) fallback


def _choose_tile(c_s, in_itemsize, out_itemsize, w_itemsize, in_buffers):
    """Byte-based, generation-aware row-tile cap + matching VMEM accounting."""
    sub = max(8, 32 // in_itemsize)            # sublane multiple: 8 f32 / 16 bf16 / 32 i8
    vmem_cap = _tpu_vmem_capacity_bytes()
    if vmem_cap >= (96 << 20):                 # v5e / v6e: 128 MiB VMEM
        target_in_tile = 12 << 20              # per input buffer
        vmem_ceiling = 64 << 20
    else:                                      # v7x: 64 MiB per TensorCore
        target_in_tile = 7 << 20
        vmem_ceiling = 40 << 20

    # Per-row pipeline cost: N-buffered input rows, double-buffered output rows
    # lane-padded 8 -> 128, plus ~2 lane-padded f32 epilogue temporaries.
    per_row = (in_buffers * c_s * in_itemsize
               + 2 * 128 * out_itemsize
               + 2 * 128 * 4)
    # Fixed cost: resident (double-buffered) weight/bias buffers (lane-padded)
    # plus headroom for Mosaic-internal scratch.
    c_s_pad = -(-c_s // 8) * 8
    fixed = 2 * c_s_pad * 128 * w_itemsize + 2 * 8 * 128 * 4 + (4 << 20)

    cap_by_vmem = max(sub, (vmem_ceiling - fixed) // per_row)
    cap_by_bytes = max(sub, target_in_tile // max(1, c_s * in_itemsize))
    cap = max(sub, min(cap_by_vmem, cap_by_bytes) // sub * sub)
    return cap, sub, vmem_ceiling, per_row, fixed


def frame_head(s, weight, bias, *, dof=3, tile_n=None, out_dtype=None, input_buffers=2):
    """
    Args:
        s:      [*, c_s] single representation (any float dtype; DMA'd natively)
        weight: [c_s, dof + 3]  (already transposed vs. torch's [out, in])
        bias:   [dof + 3]
        out_dtype: output dtype (default: s.dtype, matching the torch module)
        input_buffers: pipeline depth for the activation tile (2 = standard
            double buffering; 3 uses pl.Buffered(3) when the grid has >1 step)
    Returns:
        quats [*, 4] (normalized), trans [*, 3]
    """
    lead_shape = s.shape[:-1]
    c_s = s.shape[-1]
    n = int(np.prod(lead_shape)) if lead_shape else 1
    out_dtype = s.dtype if out_dtype is None else jnp.dtype(out_dtype)

    if n == 0:  # degenerate empty batch
        return (jnp.zeros((*lead_shape, 4), out_dtype),
                jnp.zeros((*lead_shape, 3), out_dtype))

    s2 = s.reshape(n, c_s)  # native dtype -- no wrapper cast, no padding copy
    w_pad, b_pad = _pad_params(weight, bias, dof, s2.dtype)

    in_itemsize = jnp.dtype(s2.dtype).itemsize
    out_itemsize = jnp.dtype(out_dtype).itemsize
    w_itemsize = jnp.dtype(w_pad.dtype).itemsize
    in_buffers = max(2, int(input_buffers))

    cap, sub, vmem_ceiling, per_row, fixed = _choose_tile(
        c_s, in_itemsize, out_itemsize, w_itemsize, in_buffers)

    if tile_n is None:
        tile_n = n if n <= cap else cap                    # single block if it fits
    else:
        tile_n = min(int(tile_n), n)
        if tile_n < n:                                     # tiled path: sublane-align
            tile_n = max(sub, tile_n // sub * sub)
    grid = pl.cdiv(n, tile_n)                              # ragged last tile is fine

    # Declared VMEM limit: lane-padded accounting, guaranteed >= actual footprint
    # by construction of `cap`, and bounded by the generation-aware ceiling.
    vmem_bytes = int(min(vmem_ceiling, tile_n * per_row + fixed))
    vmem_bytes = max(vmem_bytes, 8 << 20)

    s_spec_kwargs = {}
    if grid > 1 and in_buffers > 2:
        s_spec_kwargs = dict(pipeline_mode=pl.Buffered(in_buffers))

    combined = pl.pallas_call(
        _frame_head_kernel,
        out_shape=jax.ShapeDtypeStruct((n, _OUT_LANES), out_dtype),
        grid_spec=pltpu.PrefetchScalarGridSpec(
            num_scalar_prefetch=0,
            grid=(grid,),
            in_specs=[
                pl.BlockSpec((tile_n, c_s), lambda i: (i, 0), **s_spec_kwargs),
                pl.BlockSpec((c_s, _OUT_LANES), lambda i: (0, 0)),   # resident weight
                pl.BlockSpec((1, _OUT_LANES), lambda i: (0, 0)),     # resident bias
            ],
            out_specs=pl.BlockSpec((tile_n, _OUT_LANES), lambda i: (i, 0)),
        ),
        compiler_params=pltpu.CompilerParams(
            dimension_semantics=("parallel",),
            vmem_limit_bytes=vmem_bytes,
        ),
    )(s2, w_pad, b_pad)

    quats = combined[:, :4].reshape(*lead_shape, 4)
    trans = combined[:, 4:7].reshape(*lead_shape, 3)
    return quats, trans


def make_frame_head_params(key, c_s, dof=3, decouple=False, scale=0.1):
    """Deterministic parameter init.

    Note: the original uses init='final' (zeros); we use small random values so
    the kernel computes something nontrivial. `decouple=True` is handled by
    concatenating the rotation/translation linears into one [c_s, dof+3] matrix
    (mathematically identical to two separate linears).
    """
    k1, k2, k3, k4 = jax.random.split(key, 4)
    if decouple:
        w_rot = jax.random.normal(k1, (c_s, dof), jnp.float32) * scale
        w_trn = jax.random.normal(k2, (c_s, 3), jnp.float32) * scale
        b_rot = jax.random.normal(k3, (dof,), jnp.float32) * scale
        b_trn = jax.random.normal(k4, (3,), jnp.float32) * scale
        weight = jnp.concatenate([w_rot, w_trn], axis=-1)
        bias = jnp.concatenate([b_rot, b_trn], axis=-1)
    else:
        weight = jax.random.normal(k1, (c_s, dof + 3), jnp.float32) * scale
        bias = jax.random.normal(k3, (dof + 3,), jnp.float32) * scale
    return weight, bias


def _reference(s, weight, bias, dof=3):
    out = jnp.einsum("...c,cd->...d", s.astype(jnp.float32), weight) + bias
    rot = out[..., :dof]
    trans = out[..., dof:]
    if dof == 3:
        ones = jnp.ones(rot.shape[:-1] + (1,), jnp.float32)
        quats = jnp.concatenate([ones, rot], axis=-1)
    else:
        quats = rot
    quats = quats / jnp.linalg.norm(quats, axis=-1, keepdims=True)
    return quats, trans


if __name__ == "__main__":
    key = jax.random.PRNGKey(0)

    # --- case 1: small problem, single-block path (grid=(1,)), dof=3 ---------
    c_s, dof = 32, 3
    batch, seq = 2, 8
    k_s, k_p, key = jax.random.split(key, 3)
    s = jax.random.normal(k_s, (batch, seq, c_s), jnp.float32)
    weight, bias = make_frame_head_params(k_p, c_s, dof=dof)

    quats, trans = frame_head(s, weight, bias, dof=dof)
    jax.block_until_ready((quats, trans))
    q_ref, t_ref = _reference(s, weight, bias, dof=dof)
    np.testing.assert_allclose(np.asarray(quats), np.asarray(q_ref), rtol=1e-5, atol=1e-5)
    np.testing.assert_allclose(np.asarray(trans), np.asarray(t_ref), rtol=1e-5, atol=1e-5)

    # --- case 2: forced tiled path, ragged last block, native-bf16 matmul ----
    n2 = 200
    k_s2, key = jax.random.split(key)
    s2 = jax.random.normal(k_s2, (n2, c_s), jnp.float32).astype(jnp.bfloat16)
    quats2, trans2 = frame_head(s2, weight, bias, dof=dof, tile_n=128)
    jax.block_until_ready((quats2, trans2))
    q_ref2, t_ref2 = _reference(s2, weight, bias, dof=dof)
    np.testing.assert_allclose(np.asarray(quats2, dtype=np.float32),
                               np.asarray(q_ref2), rtol=2e-2, atol=2e-2)
    np.testing.assert_allclose(np.asarray(trans2, dtype=np.float32),
                               np.asarray(t_ref2), rtol=2e-2, atol=2e-2)

    # --- case 3: dof == 4 path, f32 output override ---------------------------
    k_p4, key = jax.random.split(key)
    weight4, bias4 = make_frame_head_params(k_p4, c_s, dof=4)
    quats4, trans4 = frame_head(s, weight4, bias4, dof=4, out_dtype=jnp.float32)
    jax.block_until_ready((quats4, trans4))
    q_ref4, t_ref4 = _reference(s, weight4, bias4, dof=4)
    np.testing.assert_allclose(np.asarray(quats4), np.asarray(q_ref4), rtol=1e-5, atol=1e-5)
    np.testing.assert_allclose(np.asarray(trans4), np.asarray(t_ref4), rtol=1e-5, atol=1e-5)

    print("KERNEL_OK")
</pallas_src>

<mosaic_0001>
module attributes {stable_mosaic.version = 11 : i64} {
  func.func @_frame_head_kernel(%arg0: i32, %arg1: memref<16x32xf32, #tpu.memory_space<vmem>>, %arg2: memref<32x8xf32, #tpu.memory_space<vmem>>, %arg3: memref<1x8xf32, #tpu.memory_space<vmem>>, %arg4: memref<16x8xf32, #tpu.memory_space<vmem>>) attributes {dimension_semantics = [#tpu.dimension_semantics<parallel>], iteration_bounds = array<i64: 1>, scalar_prefetch = 0 : i64, scratch_operands = 0 : i64, tpu.core_type = #tpu.core_type<tc>, window_params = [{transform_indices = @transform_0, window_bounds = array<i64: 16, 32>}, {pipeline_mode = #tpu.pipeline_mode<synchronous>, transform_indices = @transform_1, window_bounds = array<i64: 32, 8>}, {pipeline_mode = #tpu.pipeline_mode<synchronous>, transform_indices = @transform_2, window_bounds = array<i64: 1, 8>}, {transform_indices = @transform_3, window_bounds = array<i64: 16, 8>}]} {
    %c0 = arith.constant 0 : index
    %c0_0 = arith.constant 0 : index
    %0 = vector.load %arg1[%c0, %c0_0] : memref<16x32xf32, #tpu.memory_space<vmem>>, vector<16x32xf32>
    %c0_1 = arith.constant 0 : index
    %c0_2 = arith.constant 0 : index
    %1 = vector.load %arg2[%c0_1, %c0_2] : memref<32x8xf32, #tpu.memory_space<vmem>>, vector<32x8xf32>
    %c0_3 = arith.constant 0 : index
    %c0_4 = arith.constant 0 : index
    %2 = vector.load %arg3[%c0_3, %c0_4] : memref<1x8xf32, #tpu.memory_space<vmem>>, vector<1x8xf32>
    %cst = arith.constant dense<0.000000e+00> : vector<16x8xf32>
    %3 = tpu.matmul %0, %1, %cst {dimension_numbers = #tpu.dot_dimension_numbers<[1], [0], [0], [1], [0, 0, 1, 1], [], []>} : vector<16x32xf32>, vector<32x8xf32>, vector<16x8xf32> -> vector<16x8xf32>
    %4 = vector.broadcast %2 : vector<1x8xf32> to vector<16x8xf32>
    %5 = arith.addf %3, %4 : vector<16x8xf32>
    %6 = tpu.iota {dimensions = array<i32: 1>} : vector<1x8xi32>
    %c4_i32 = arith.constant 4 : i32
    %7 = vector.broadcast %c4_i32 : i32 to vector<1x8xi32>
    %8 = arith.cmpi slt, %6, %7 : vector<1x8xi32>
    %cst_5 = arith.constant 0.000000e+00 : f32
    %9 = vector.shape_cast %8 : vector<1x8xi1> to vector<1x8xi1>
    %10 = vector.broadcast %9 : vector<1x8xi1> to vector<16x8xi1>
    %11 = vector.broadcast %cst_5 : f32 to vector<16x8xf32>
    %12 = arith.select %10, %5, %11 : vector<16x8xi1>, vector<16x8xf32>
    %13 = arith.mulf %12, %12 : vector<16x8xf32>
    %cst_6 = arith.constant dense<0.000000e+00> : vector<16xf32>
    %14 = vector.multi_reduction <add>, %13, %cst_6 [1] : vector<16x8xf32> to vector<16xf32>
    %15 = vector.shape_cast %14 : vector<16xf32> to vector<16x1xf32>
    %16 = math.rsqrt %15 : vector<16x1xf32>
    %17 = vector.broadcast %16 : vector<16x1xf32> to vector<16x8xf32>
    %18 = arith.mulf %5, %17 : vector<16x8xf32>
    %19 = vector.shape_cast %8 : vector<1x8xi1> to vector<1x8xi1>
    %20 = vector.broadcast %19 : vector<1x8xi1> to vector<16x8xi1>
    %21 = arith.select %20, %18, %5 : vector<16x8xi1>, vector<16x8xf32>
    %c0_7 = arith.constant 0 : index
    %c0_8 = arith.constant 0 : index
    %22 = vector.load %arg4[%c0_7, %c0_8] : memref<16x8xf32, #tpu.memory_space<vmem>>, vector<16x8xf32>
    tpu.vector_store %arg4[%c0_7, %c0_8], %21 {strides = array<i32>} : memref<16x8xf32, #tpu.memory_space<vmem>>, vector<16x8xf32>,
    return
  }
  func.func @transform_0(%arg0: i32) -> (i32, i32) {
    %c0_i32 = arith.constant 0 : i32
    %c0_i32_0 = arith.constant 0 : i32
    return %arg0, %c0_i32 : i32, i32
  }
  func.func @transform_1(%arg0: i32) -> (i32, i32) {
    %c0_i32 = arith.constant 0 : i32
    %c0_i32_0 = arith.constant 0 : i32
    %c0_i32_1 = arith.constant 0 : i32
    return %c0_i32, %c0_i32_0 : i32, i32
  }
  func.func @transform_2(%arg0: i32) -> (i32, i32) {
    %c0_i32 = arith.constant 0 : i32
    %c0_i32_0 = arith.constant 0 : i32
    %c0_i32_1 = arith.constant 0 : i32
    return %c0_i32, %c0_i32_0 : i32, i32
  }
  func.func @transform_3(%arg0: i32) -> (i32, i32) {
    %c0_i32 = arith.constant 0 : i32
    %c0_i32_0 = arith.constant 0 : i32
    return %arg0, %c0_i32 : i32, i32
  }
}

</mosaic_0001>

<llo_original>
// kernel: tpu_custom_call.1
$region0: #{tpu_custom_call.1}
  #allocation0 [shape = 'u32[]', space=smem, size = 0x4, offset = 0x4, fixed_abs, tag = 'smem constant byte address 0x4 - core index']
  #allocation1 [shape = 'u32[144,128]{1,0:T(1,128)}', space=vmem, size = 0x12000, scoped, tag = 'internal scratch']
  %s0 = inlined_call_operand.vmem [shape: f32[16,32], index: 0, kind: input, shape index: {}]
  %s1 = inlined_call_operand.vmem [shape: f32[32,8], index: 1, kind: input, shape index: {}]
  %s2 = inlined_call_operand.vmem [shape: f32[1,8], index: 2, kind: input, shape index: {}]
  %s3 = inlined_call_operand.vmem [shape: f32[16,8], index: 3, kind: output, shape index: {}]
  %s4 = sld [smem:[#allocation0]]
  $region22: #{tpu_custom_call.1} parent=0
    _
  %s6 = ssub.s32 1, %s4
  %s7 = scalar_select 0, %s6, %s4
  // Predicated region
  $region2: #{tpu_custom_call.1} parent=0 // pred_check
    _
  $region3: #{tpu_custom_call.1} parent=0 // pred_check_branch
    %9 = sbr.rel (0) target = $region5
  $region4: #{tpu_custom_call.1} parent=0 // pred_region
    _
  $region5: #{tpu_custom_call.1} parent=0 // pred_fallthru
    _
  // Predicated region
  $region6: #{tpu_custom_call.1} parent=0 // pred_check
    _
  $region7: #{tpu_custom_call.1} parent=0 // pred_check_branch
    %11 = sbr.rel (0) target = $region9
  $region8: #{tpu_custom_call.1} parent=0 // pred_region
    _
  $region9: #{tpu_custom_call.1} parent=0 // pred_fallthru
    _
  // Predicated region
  $region10: #{tpu_custom_call.1} parent=0 // pred_check
    _
  $region11: #{tpu_custom_call.1} parent=0 // pred_check_branch
    %13 = sbr.rel (0) target = $region13
  $region12: #{tpu_custom_call.1} parent=0 // pred_region
    _
  $region13: #{tpu_custom_call.1} parent=0 // pred_fallthru
    _
  %v14 = vld [vmem:[%s0] sm:$0xff]
  %v15 = vld [vmem:[%s0 + $0x8] sm:$0xff]
  %v16 = vld [vmem:[%s1] sm:$0xff]
  %v17 = vld [vmem:[%s1 + $0x8] sm:$0xff]
  %v18 = vld [vmem:[%s1 + $0x10] sm:$0xff]
  %v19 = vld [vmem:[%s1 + $0x18] sm:$0xff]
  %v20 = vld [vmem:[%s2] sm:$0x1]
  %v22 = vlaneseq
  %v23 = vshrl.u32 %v22, 7
  %v24 = vsub.s32 0, %v23
  %v25 = vrot.slane %v20, %v24
  %vm27 = vcmask 261120
  %v29 = vsel %vm27, %v14, 0
  %v32 = vsel %vm27, %v15, 0
  %34 = vmatprep.subr.mxu0 0.0
  %35 = vmatpush1.msra.mxu0 %v16
  %36 = vmatprep.subr.mxu0 0.0
  %37 = vmatpush1.msra.mxu0 %v17
  %38 = vmatprep.subr.mxu0 0.0
  %39 = vmatpush1.msra.mxu0 %v18
  %40 = vmatprep.subr.mxu0 0.0
  %41 = vmatpush1.msra.mxu0 %v19
  %42 = vmatprep.subr.mxu0 0.0
  %43 = vmatpush1.msra.mxu0 0.0
  %44 = vmatprep.subr.mxu0 0.0
  %45 = vmatpush1.msra.mxu0 0.0
  %46 = vmatprep.subr.mxu0 0.0
  %47 = vmatpush1.msra.mxu0 0.0
  %48 = vmatprep.subr.mxu0 0.0
  %49 = vmatpush1.msra.mxu0 0.0
  %50 = vmatprep.subr.mxu0 0.0
  %51 = vmatpush1.msra.mxu0 0.0
  %52 = vmatprep.subr.mxu0 0.0
  %53 = vmatpush1.msra.mxu0 0.0
  %54 = vmatprep.subr.mxu0 0.0
  %55 = vmatpush1.msra.mxu0 0.0
  %56 = vmatprep.subr.mxu0 0.0
  %57 = vmatpush1.msra.mxu0 0.0
  %58 = vmatprep.subr.mxu0 0.0
  %59 = vmatpush1.msra.mxu0 0.0
  %60 = vmatprep.subr.mxu0 0.0
  %61 = vmatpush1.msra.mxu0 0.0
  %62 = vmatprep.subr.mxu0 0.0
  %63 = vmatpush1.msra.mxu0 0.0
  %64 = vmatprep.subr.mxu0 0.0
  %65 = vmatpush1.msra.mxu0 0.0
  %66 = vmatprep.subr.mxu0 0.0
  %67 = vmatpush1.msra.mxu0 0.0
  %68 = vmatprep.subr.mxu0 0.0
  %69 = vmatpush1.msra.mxu0 0.0
  %70 = vmatprep.subr.mxu0 0.0
  %71 = vmatpush1.msra.mxu0 0.0
  %72 = vmatprep.subr.mxu0 0.0
  %73 = vmatpush1.msra.mxu0 0.0
  %74 = vmatprep.subr.mxu0 0.0
  %75 = vmatpush1.msra.mxu0 0.0
  %76 = vmatprep.subr.mxu0 0.0
  %77 = vmatpush1.msra.mxu0 0.0
  %78 = vmatprep.subr.mxu0 0.0
  %79 = vmatpush1.msra.mxu0 0.0
  %80 = vmatprep.subr.mxu0 0.0
  %81 = vmatpush1.msra.mxu0 0.0
  %82 = vmatprep.subr.mxu0 0.0
  %83 = vmatpush1.msra.mxu0 0.0
  %84 = vmatprep.subr.mxu0 0.0
  %85 = vmatpush1.msra.mxu0 0.0
  %86 = vmatprep.subr.mxu0 0.0
  %87 = vmatpush1.msra.mxu0 0.0
  %88 = vmatprep.subr.mxu0 0.0
  %89 = vmatpush1.msra.mxu0 0.0
  %90 = vmatprep.subr.mxu0 0.0
  %91 = vmatpush1.msra.mxu0 0.0
  %92 = vmatprep.subr.mxu0 0.0
  %93 = vmatpush1.msra.mxu0 0.0
  %94 = vmatprep.subr.mxu0 0.0
  %95 = vmatpush1.msra.mxu0 0.0
  %96 = vmatprep.subr.mxu0 0.0
  %97 = vmatpush1.msra.mxu0 0.0
  %98 = vmatprep.mubr.f32.mxu0 0.0
  %99 = vmatmul.mubr.f32.gmra.mrb[0].mxu0 %v29
  %v100 = vpop.f32.mrb[0].mxu0
  %v101 = vadd.f32 %v25, %v100
  %v102 = vpop.f32.mrb[0].mxu0
  %103 = vmatprep.mubr.f32.mxu0 0.0
  %104 = vmatmul.mubr.f32.gmra.mrb[0].mxu0 %v32
  %v105 = vpop.f32.mrb[0].mxu0
  %v106 = vadd.f32 %v25, %v105
  %v107 = vpop.f32.mrb[0].mxu0
  %108 = vdwg.mxu0
  %v109 = vlaneseq
  %v110 = vand.u32 %v109, 127
  %vm111 = vcmp.lt.s32.totalorder %v110, 4
  %v112 = vsel %vm111, 1, 0
  %vm113 = vcmp.eq.s32.totalorder %v112, 1
  %v114 = vsel %vm113, %v101, 0.0
  %v115 = vsel %vm113, %v106, 0.0
  %v116 = vmul.f32 %v114, %v114
  %v117 = vmul.f32 %v115, %v115
  %vm118 = vcmask 64512
  %v119 = vsel %vm118, %v116, 0.0
  %120 = vadd.xlane.f32.xlu0 %v119
  %v121 = vpop.xlane.xlu0 %120
  %v122 = vsel %vm118, %v117, 0.0
  %123 = vadd.xlane.f32.xlu0 %v122
  %v124 = vpop.xlane.xlu0 %123
  %v125 = vrsqrt.pop %v121
  %v126 = vrsqrt.pop %v124
  %v127 = vmul.f32 %v101, %v125
  %v128 = vmul.f32 %v106, %v126
  %v129 = vsel %vm113, %v127, %v101
  %v130 = vsel %vm113, %v128, %v106
  %131 = vst.msk [vmem:[%s3] sm:$0xff] %vm118, %v129
  %132 = vst.msk [vmem:[%s3 + $0x8] sm:$0xff] %vm118, %v130
  // Predicated region
  $region14: #{tpu_custom_call.1} parent=0 // pred_check
    _
  $region15: #{tpu_custom_call.1} parent=0 // pred_check_branch
    %134 = sbr.rel (0) target = $region17
  $region16: #{tpu_custom_call.1} parent=0 // pred_region
    _
  $region17: #{tpu_custom_call.1} parent=0 // pred_fallthru
    _
  // Predicated region
  $region18: #{tpu_custom_call.1} parent=0 // pred_check
    _
  $region19: #{tpu_custom_call.1} parent=0 // pred_check_branch
    %136 = sbr.rel (0) target = $region21
  $region20: #{tpu_custom_call.1} parent=0 // pred_region
    _
  $region21: #{tpu_custom_call.1} parent=0 // pred_fallthru
    _

</llo_original>
